<compile_context>
chip_gen: v7x
topology: tpu7x:2x2x1
jax: 0.10.0
libtpu: 0.0.40
codegen_flags: <defaults>
</compile_context>

<pallas_src>
import functools
import math

import jax
import jax.numpy as jnp
from jax.experimental import pallas as pl
from jax.experimental.pallas import tpu as pltpu

PAD = 128  # lane width / padded feature dim for all layers


def ppo_fused_kernel(x_ref, w_ref, b_ref, out_ref, *, s_dim, n_actions):
    """x_ref: (B, S); w_ref: (3, 128, 128); b_ref: (3, 128); out_ref: (B, 128)."""
    x = x_ref[...]                      # (B, S)
    b = b_ref[...]                      # (3, 128)

    # Layer 1: only the first S rows of the padded W1 slab are meaningful.
    w1 = w_ref[0, :s_dim, :]            # (S, 128) static, sublane-aligned slice
    h1 = jnp.tanh(
        jnp.dot(x, w1, preferred_element_type=jnp.float32) + b[0:1, :]
    )                                   # (B, 128); padded lanes are tanh(0) = 0

    # Layer 2: padded rows/cols of W2 are zero, so padded lanes stay 0.
    h2 = jnp.tanh(
        jnp.dot(h1, w_ref[1], preferred_element_type=jnp.float32) + b[1:2, :]
    )                                   # (B, 128)

    # Fused heads: columns [0, n_actions) = actor logits, column n_actions = critic.
    logits = (
        jnp.dot(h2, w_ref[2], preferred_element_type=jnp.float32) + b[2:3, :]
    )                                   # (B, 128); lanes > n_actions are 0

    # Numerically stable softmax restricted to the actor lanes.
    col = jax.lax.broadcasted_iota(jnp.int32, logits.shape, 1)
    actor_mask = col < n_actions
    neg_big = jnp.float32(-1e30)
    m = jnp.max(jnp.where(actor_mask, logits, neg_big), axis=-1, keepdims=True)
    e = jnp.where(actor_mask, jnp.exp(logits - m), 0.0)
    denom = jnp.sum(e, axis=-1, keepdims=True)
    probs = e * pl.reciprocal(denom, approx=False)   # exact; EUP/divide path

    # Lane-dense output slab: probs in lanes [0, n_actions), critic at lane n_actions.
    out = jnp.where(col == n_actions, logits, probs)
    out_ref[...] = out.astype(out_ref.dtype)


def prepare_params(params):
    """One-time packing of PyTorch-layout params into two padded VMEM slabs.

    Returns:
      w_packed: (3, 128, 128) f32  -- [W1 | W2 | Wac], each (in, out) layout, zero padded.
      b_packed: (3, 128)      f32  -- [b1 | b2 | bac], zero padded.
    """
    w1 = params["l1_w"].T                                   # (S,  d1)
    w2 = params["l2_w"].T                                   # (d1, d2)
    wac = jnp.concatenate([params["actor_w"].T,             # (d2, n_actions)
                           params["critic_w"].T], axis=1)   # (d2, n_actions + 1)
    bac = jnp.concatenate([params["actor_b"], params["critic_b"]])

    for w in (w1, w2, wac):
        assert w.shape[0] <= PAD and w.shape[1] <= PAD, "layer dims must be <= 128"

    def pad2(w):
        return jnp.pad(w, ((0, PAD - w.shape[0]), (0, PAD - w.shape[1])))

    def pad1(v):
        return jnp.pad(v, (0, PAD - v.shape[0]))

    w_packed = jnp.stack([pad2(w1), pad2(w2), pad2(wac)]).astype(jnp.float32)
    b_packed = jnp.stack([pad1(params["l1_b"]),
                          pad1(params["l2_b"]),
                          pad1(bac)]).astype(jnp.float32)
    return w_packed, b_packed


def ppo_forward(x, w_packed, b_packed, *, n_actions):
    """x: (B, S) float32. Returns (actor (B, n_actions), critic (B, 1))."""
    B, S = x.shape
    kernel = functools.partial(ppo_fused_kernel, s_dim=S, n_actions=n_actions)
    vmem = pl.BlockSpec(memory_space=pltpu.MemorySpace.VMEM)

    out = pl.pallas_call(
        kernel,
        out_shape=jax.ShapeDtypeStruct((B, PAD), jnp.float32),
        in_specs=[vmem, vmem, vmem],
        out_specs=vmem,
    )(x, w_packed, b_packed)

    actor = out[:, :n_actions]
    critic = out[:, n_actions:n_actions + 1]
    return actor, critic


def init_linear(key, out_features, in_features):
    """Deterministic PyTorch-default-style init: U(-1/sqrt(in), 1/sqrt(in))."""
    kw, kb = jax.random.split(key)
    bound = 1.0 / math.sqrt(in_features)
    w = jax.random.uniform(kw, (out_features, in_features), jnp.float32, -bound, bound)
    b = jax.random.uniform(kb, (out_features,), jnp.float32, -bound, bound)
    return w, b


def reference_forward(x, params):
    h1 = jnp.tanh(x @ params["l1_w"].T + params["l1_b"])
    h2 = jnp.tanh(h1 @ params["l2_w"].T + params["l2_b"])
    logits = h2 @ params["actor_w"].T + params["actor_b"]
    actor = jax.nn.softmax(logits, axis=-1)
    critic = h2 @ params["critic_w"].T + params["critic_b"]
    return actor, critic


if __name__ == "__main__":
    # Small shapes consistent with the module's simple architecture:
    #   state_shape = 16, CONFIG.ppo.dimensions = [32, 32], n_actions = 9, batch = 4
    batch = 4
    state_shape = 16
    d1, d2 = 32, 32
    n_actions = 9

    key = jax.random.PRNGKey(0)
    kx, k1, k2, ka, kc = jax.random.split(key, 5)

    x = jax.random.normal(kx, (batch, state_shape), jnp.float32)

    l1_w, l1_b = init_linear(k1, d1, state_shape)
    l2_w, l2_b = init_linear(k2, d2, d1)
    actor_w, actor_b = init_linear(ka, n_actions, d2)
    critic_w, critic_b = init_linear(kc, 1, d2)

    params = {
        "l1_w": l1_w, "l1_b": l1_b,
        "l2_w": l2_w, "l2_b": l2_b,
        "actor_w": actor_w, "actor_b": actor_b,
        "critic_w": critic_w, "critic_b": critic_b,
    }

    # One-time parameter packing (transposes / concat / padding hoisted out of the call path).
    w_packed, b_packed = prepare_params(params)

    actor, critic = ppo_forward(x, w_packed, b_packed, n_actions=n_actions)
    jax.block_until_ready((actor, critic))

    # Verify against pure-JAX reference of the PyTorch forward.
    actor_ref, critic_ref = reference_forward(x, params)
    assert actor.shape == (batch, n_actions)
    assert critic.shape == (batch, 1)
    assert jnp.allclose(actor, actor_ref, atol=1e-5, rtol=1e-5)
    assert jnp.allclose(critic, critic_ref, atol=1e-5, rtol=1e-5)
    assert jnp.allclose(jnp.sum(actor, axis=-1), 1.0, atol=1e-5)

    print("KERNEL_OK")
</pallas_src>

<mosaic_0001>
module attributes {stable_mosaic.version = 11 : i64} {
  func.func @ppo_fused_kernel(%arg0: memref<4x16xf32, #tpu.memory_space<vmem>>, %arg1: memref<3x128x128xf32, #tpu.memory_space<vmem>>, %arg2: memref<3x128xf32, #tpu.memory_space<vmem>>, %arg3: memref<4x128xf32, #tpu.memory_space<vmem>>) attributes {dimension_semantics = [], scalar_prefetch = 0 : i64, scratch_operands = 0 : i64, tpu.core_type = #tpu.core_type<tc>} {
    %c0 = arith.constant 0 : index
    %c0_0 = arith.constant 0 : index
    %0 = vector.load %arg0[%c0, %c0_0] : memref<4x16xf32, #tpu.memory_space<vmem>>, vector<4x16xf32>
    %c0_1 = arith.constant 0 : index
    %c0_2 = arith.constant 0 : index
    %1 = vector.load %arg2[%c0_1, %c0_2] : memref<3x128xf32, #tpu.memory_space<vmem>>, vector<3x128xf32>
    %c0_3 = arith.constant 0 : index
    %c0_4 = arith.constant 0 : index
    %c0_5 = arith.constant 0 : index
    %2 = vector.load %arg1[%c0_3, %c0_4, %c0_5] : memref<3x128x128xf32, #tpu.memory_space<vmem>>, vector<1x16x128xf32>
    %3 = vector.shape_cast %2 : vector<1x16x128xf32> to vector<16x128xf32>
    %cst = arith.constant dense<0.000000e+00> : vector<4x128xf32>
    %4 = tpu.matmul %0, %3, %cst {dimension_numbers = #tpu.dot_dimension_numbers<[1], [0], [0], [1], [0, 0, 1, 1], [], []>} : vector<4x16xf32>, vector<16x128xf32>, vector<4x128xf32> -> vector<4x128xf32>
    %5 = vector.extract_strided_slice %1 {offsets = [0, 0], sizes = [1, 128], strides = [1, 1]} : vector<3x128xf32> to vector<1x128xf32>
    %6 = vector.broadcast %5 : vector<1x128xf32> to vector<4x128xf32>
    %7 = arith.addf %4, %6 : vector<4x128xf32>
    %8 = math.tanh %7 : vector<4x128xf32>
    %c1 = arith.constant 1 : index
    %c0_6 = arith.constant 0 : index
    %c0_7 = arith.constant 0 : index
    %9 = vector.load %arg1[%c1, %c0_6, %c0_7] : memref<3x128x128xf32, #tpu.memory_space<vmem>>, vector<1x128x128xf32>
    %10 = vector.shape_cast %9 : vector<1x128x128xf32> to vector<128x128xf32>
    %cst_8 = arith.constant dense<0.000000e+00> : vector<4x128xf32>
    %11 = tpu.matmul %8, %10, %cst_8 {dimension_numbers = #tpu.dot_dimension_numbers<[1], [0], [0], [1], [0, 0, 1, 1], [], []>} : vector<4x128xf32>, vector<128x128xf32>, vector<4x128xf32> -> vector<4x128xf32>
    %12 = vector.extract_strided_slice %1 {offsets = [1, 0], sizes = [1, 128], strides = [1, 1]} : vector<3x128xf32> to vector<1x128xf32>
    %13 = vector.broadcast %12 : vector<1x128xf32> to vector<4x128xf32>
    %14 = arith.addf %11, %13 : vector<4x128xf32>
    %15 = math.tanh %14 : vector<4x128xf32>
    %c2 = arith.constant 2 : index
    %c0_9 = arith.constant 0 : index
    %c0_10 = arith.constant 0 : index
    %16 = vector.load %arg1[%c2, %c0_9, %c0_10] : memref<3x128x128xf32, #tpu.memory_space<vmem>>, vector<1x128x128xf32>
    %17 = vector.shape_cast %16 : vector<1x128x128xf32> to vector<128x128xf32>
    %cst_11 = arith.constant dense<0.000000e+00> : vector<4x128xf32>
    %18 = tpu.matmul %15, %17, %cst_11 {dimension_numbers = #tpu.dot_dimension_numbers<[1], [0], [0], [1], [0, 0, 1, 1], [], []>} : vector<4x128xf32>, vector<128x128xf32>, vector<4x128xf32> -> vector<4x128xf32>
    %19 = vector.extract_strided_slice %1 {offsets = [2, 0], sizes = [1, 128], strides = [1, 1]} : vector<3x128xf32> to vector<1x128xf32>
    %20 = vector.broadcast %19 : vector<1x128xf32> to vector<4x128xf32>
    %21 = arith.addf %18, %20 : vector<4x128xf32>
    %22 = tpu.iota {dimensions = array<i32: 1>} : vector<4x128xi32>
    %c9_i32 = arith.constant 9 : i32
    %23 = vector.broadcast %c9_i32 : i32 to vector<4x128xi32>
    %24 = arith.cmpi slt, %22, %23 : vector<4x128xi32>
    %cst_12 = arith.constant -1.000000e+30 : f32
    %25 = vector.broadcast %cst_12 : f32 to vector<4x128xf32>
    %26 = arith.select %24, %21, %25 : vector<4x128xi1>, vector<4x128xf32>
    %cst_13 = arith.constant dense<0xFF800000> : vector<4xf32>
    %27 = vector.multi_reduction <maximumf>, %26, %cst_13 [1] : vector<4x128xf32> to vector<4xf32>
    %28 = vector.shape_cast %27 : vector<4xf32> to vector<4x1xf32>
    %29 = vector.broadcast %28 : vector<4x1xf32> to vector<4x128xf32>
    %30 = arith.subf %21, %29 : vector<4x128xf32>
    %31 = math.exp %30 : vector<4x128xf32>
    %cst_14 = arith.constant 0.000000e+00 : f32
    %32 = vector.broadcast %cst_14 : f32 to vector<4x128xf32>
    %33 = arith.select %24, %31, %32 : vector<4x128xi1>, vector<4x128xf32>
    %cst_15 = arith.constant dense<0.000000e+00> : vector<4xf32>
    %34 = vector.multi_reduction <add>, %33, %cst_15 [1] : vector<4x128xf32> to vector<4xf32>
    %35 = vector.shape_cast %34 : vector<4xf32> to vector<4x1xf32>
    %36 = tpu.reciprocal %35 : vector<4x1xf32> -> vector<4x1xf32>
    %37 = vector.broadcast %36 : vector<4x1xf32> to vector<4x128xf32>
    %38 = arith.mulf %33, %37 : vector<4x128xf32>
    %c9_i32_16 = arith.constant 9 : i32
    %39 = vector.broadcast %c9_i32_16 : i32 to vector<4x128xi32>
    %40 = arith.cmpi eq, %22, %39 : vector<4x128xi32>
    %41 = arith.select %40, %21, %38 : vector<4x128xi1>, vector<4x128xf32>
    %c0_17 = arith.constant 0 : index
    %c0_18 = arith.constant 0 : index
    %42 = vector.load %arg3[%c0_17, %c0_18] : memref<4x128xf32, #tpu.memory_space<vmem>>, vector<4x128xf32>
    tpu.vector_store %arg3[%c0_17, %c0_18], %41 {strides = array<i32>} : memref<4x128xf32, #tpu.memory_space<vmem>>, vector<4x128xf32>,
    return
  }
}

</mosaic_0001>

<llo_original>
// kernel: tpu_custom_call.1
$region0: #{tpu_custom_call.1}
  #allocation0 [shape = 'u32[]', space=smem, size = 0x4, offset = 0x4, fixed_abs, tag = 'smem constant byte address 0x4 - core index']
  #allocation1 [shape = 'u32[144,128]{1,0:T(1,128)}', space=vmem, size = 0x12000, scoped, tag = 'internal scratch']
  %s0 = inlined_call_operand.hbm [shape: f32[4,16], index: 0, kind: input, shape index: {}]
  %s1 = inlined_call_operand.hbm [shape: f32[3,128,128], index: 1, kind: input, shape index: {}]
  %s2 = inlined_call_operand.vmem [shape: f32[3,128], index: 2, kind: input, shape index: {}]
  %s3 = inlined_call_operand.hbm [shape: f32[4,128], index: 3, kind: output, shape index: {}]
  %s4 = sld [smem:[#allocation0]]
  $region30: #{tpu_custom_call.1} parent=0
    _
  %s6 = ssub.s32 1, %s4
  %s7 = scalar_select 0, %s6, %s4
  $region1: #{tpu_custom_call.1} parent=0
    #allocation2 [shape = 'u8[2048]{0}', space=vmem, size = 0x800, scoped, tag = 'input window, operand 0, single buffered']
    #allocation3 [shape = 's32[1]{0}', space=sflag, size = 0x4, scoped, tag = 'scoped memory for tpu_custom_call.1']
    #allocation4 [shape = 's32[1]{0}', space=sflag, size = 0x4, scoped, tag = 'scoped memory for tpu_custom_call.1']
    #allocation5 [shape = 'u8[196608]{0}', space=vmem, size = 0x30000, scoped, tag = 'input window, operand 1, single buffered']
    #allocation6 [shape = 's32[1]{0}', space=sflag, size = 0x4, scoped, tag = 'scoped memory for tpu_custom_call.1']
    #allocation7 [shape = 'u8[2048]{0}', space=vmem, size = 0x800, scoped, tag = 'output window, operand 0, single buffered']
    %8 = vsyncpa [#allocation3], 0
    %9 = vsyncpa [#allocation6], 0
    %10 = vsyncpa [#allocation4], 0
    // Predicated region
    $region2: #{tpu_custom_call.1} parent=1 // pred_check
      _
    $region3: #{tpu_custom_call.1} parent=1 // pred_check_branch
      %12 = sbr.rel (0) target = $region5
    $region4: #{tpu_custom_call.1} parent=1 // pred_region
      %s14 = ssub.s32 64, 64
      %15 = vsyncadd [#allocation3], %s14
      %s17 = sshll.u32 [#allocation2], 4
      %s18 = int_to_ptr.vmem [resolvable:$true] %s17
      %20 = dma.hbm_to_vmem [thread:$0]  %s0, 64, %s18, [#allocation3]
    $region5: #{tpu_custom_call.1} parent=1 // pred_fallthru
      _
    // Predicated region
    $region6: #{tpu_custom_call.1} parent=1 // pred_check
      _
    $region7: #{tpu_custom_call.1} parent=1 // pred_check_branch
      %22 = sbr.rel (0) target = $region9
    $region8: #{tpu_custom_call.1} parent=1 // pred_region
      %s24 = ssub.s32 6144, 6144
      %25 = vsyncadd [#allocation6], %s24
      %s26 = sshll.u32 [#allocation5], 4
      %s27 = int_to_ptr.vmem [resolvable:$true] %s26
      %32 = dma.hbm_to_vmem [thread:$0]  %s1, 6144, %s27, [#allocation6], 128, 128, 8
    $region9: #{tpu_custom_call.1} parent=1 // pred_fallthru
      _
    // Predicated region
    $region10: #{tpu_custom_call.1} parent=1 // pred_check
      _
    $region11: #{tpu_custom_call.1} parent=1 // pred_check_branch
      %34 = sbr.rel (0) target = $region13
    $region12: #{tpu_custom_call.1} parent=1 // pred_region
      _
    $region13: #{tpu_custom_call.1} parent=1 // pred_fallthru
      _
    // Predicated region
    $region14: #{tpu_custom_call.1} parent=1 // pred_check
      _
    $region15: #{tpu_custom_call.1} parent=1 // pred_check_branch
      %36 = sbr.rel (0) target = $region17
    $region16: #{tpu_custom_call.1} parent=1 // pred_region
      %37 = dma.done [#allocation3], 64
    $region17: #{tpu_custom_call.1} parent=1 // pred_fallthru
      _
    // Predicated region
    $region18: #{tpu_custom_call.1} parent=1 // pred_check
      _
    $region19: #{tpu_custom_call.1} parent=1 // pred_check_branch
      %39 = sbr.rel (0) target = $region21
    $region20: #{tpu_custom_call.1} parent=1 // pred_region
      %40 = dma.done [#allocation6], 6144
    $region21: #{tpu_custom_call.1} parent=1 // pred_fallthru
      _
    %v41 = vld [vmem:[#allocation2] sm:$0xf]
    %v42 = vld [vmem:[%s2] sm:$0x7]
    %v43 = vld [vmem:[#allocation5] sm:$0xff]
    %v44 = vld [vmem:[#allocation5 + $0x8] sm:$0xff]
    %v45 = vlaneseq
    %v46 = vshrl.u32 %v45, 7
    %v47 = vsub.s32 0, %v46
    %v48 = vrot.slane %v42, %v47
    %vm49 = vcmask 130048
    %v51 = vsel %vm49, %v41, 0
    %53 = vmatprep.subr.mxu0 0.0
    %54 = vmatpush1.msra.mxu0 %v43
    %55 = vmatprep.subr.mxu0 0.0
    %56 = vmatpush1.msra.mxu0 %v44
    %57 = vmatprep.subr.mxu0 0.0
    %58 = vmatpush1.msra.mxu0 0.0
    %59 = vmatprep.subr.mxu0 0.0
    %60 = vmatpush1.msra.mxu0 0.0
    %61 = vmatprep.subr.mxu0 0.0
    %62 = vmatpush1.msra.mxu0 0.0
    %63 = vmatprep.subr.mxu0 0.0
    %64 = vmatpush1.msra.mxu0 0.0
    %65 = vmatprep.subr.mxu0 0.0
    %66 = vmatpush1.msra.mxu0 0.0
    %67 = vmatprep.subr.mxu0 0.0
    %68 = vmatpush1.msra.mxu0 0.0
    %69 = vmatprep.subr.mxu0 0.0
    %70 = vmatpush1.msra.mxu0 0.0
    %71 = vmatprep.subr.mxu0 0.0
    %72 = vmatpush1.msra.mxu0 0.0
    %73 = vmatprep.subr.mxu0 0.0
    %74 = vmatpush1.msra.mxu0 0.0
    %75 = vmatprep.subr.mxu0 0.0
    %76 = vmatpush1.msra.mxu0 0.0
    %77 = vmatprep.subr.mxu0 0.0
    %78 = vmatpush1.msra.mxu0 0.0
    %79 = vmatprep.subr.mxu0 0.0
    %80 = vmatpush1.msra.mxu0 0.0
    %81 = vmatprep.subr.mxu0 0.0
    %82 = vmatpush1.msra.mxu0 0.0
    %83 = vmatprep.subr.mxu0 0.0
    %84 = vmatpush1.msra.mxu0 0.0
    %85 = vmatprep.subr.mxu0 0.0
    %86 = vmatpush1.msra.mxu0 0.0
    %87 = vmatprep.subr.mxu0 0.0
    %88 = vmatpush1.msra.mxu0 0.0
    %89 = vmatprep.subr.mxu0 0.0
    %90 = vmatpush1.msra.mxu0 0.0
    %91 = vmatprep.subr.mxu0 0.0
    %92 = vmatpush1.msra.mxu0 0.0
    %93 = vmatprep.subr.mxu0 0.0
    %94 = vmatpush1.msra.mxu0 0.0
    %95 = vmatprep.subr.mxu0 0.0
    %96 = vmatpush1.msra.mxu0 0.0
    %97 = vmatprep.subr.mxu0 0.0
    %98 = vmatpush1.msra.mxu0 0.0
    %99 = vmatprep.subr.mxu0 0.0
    %100 = vmatpush1.msra.mxu0 0.0
    %101 = vmatprep.subr.mxu0 0.0
    %102 = vmatpush1.msra.mxu0 0.0
    %103 = vmatprep.subr.mxu0 0.0
    %104 = vmatpush1.msra.mxu0 0.0
    %105 = vmatprep.subr.mxu0 0.0
    %106 = vmatpush1.msra.mxu0 0.0
    %107 = vmatprep.subr.mxu0 0.0
    %108 = vmatpush1.msra.mxu0 0.0
    %109 = vmatprep.subr.mxu0 0.0
    %110 = vmatpush1.msra.mxu0 0.0
    %111 = vmatprep.subr.mxu0 0.0
    %112 = vmatpush1.msra.mxu0 0.0
    %113 = vmatprep.subr.mxu0 0.0
    %114 = vmatpush1.msra.mxu0 0.0
    %115 = vmatprep.subr.mxu0 0.0
    %116 = vmatpush1.msra.mxu0 0.0
    %117 = vmatprep.mubr.f32.mxu0 0.0
    %118 = vmatmul.mubr.f32.gmra.mrb[0].mxu0 %v51
    %v119 = vpop.f32.mrb[0].mxu0
    %v120 = vadd.f32 %v48, %v119
    %v121 = vpop.f32.mrb[0].mxu0
    %122 = vdwg.mxu0
    %v123 = vtanh.pop %v120
    %s124 = scalar_lea.vmem [#allocation5], 128
    %v125 = vld [vmem:[%s124] sm:$0xff]
    %v126 = vld [vmem:[%s124 + $0x8] sm:$0xff]
    %v127 = vld [vmem:[%s124 + $0x10] sm:$0xff]
    %v128 = vld [vmem:[%s124 + $0x18] sm:$0xff]
    %v129 = vld [vmem:[%s124 + $0x20] sm:$0xff]
    %v130 = vld [vmem:[%s124 + $0x28] sm:$0xff]
    %v131 = vld [vmem:[%s124 + $0x30] sm:$0xff]
    %v132 = vld [vmem:[%s124 + $0x38] sm:$0xff]
    %v133 = vld [vmem:[%s124 + $0x40] sm:$0xff]
    %v134 = vld [vmem:[%s124 + $0x48] sm:$0xff]
    %v135 = vld [vmem:[%s124 + $0x50] sm:$0xff]
    %v136 = vld [vmem:[%s124 + $0x58] sm:$0xff]
    %v137 = vld [vmem:[%s124 + $0x60] sm:$0xff]
    %v138 = vld [vmem:[%s124 + $0x68] sm:$0xff]
    %v139 = vld [vmem:[%s124 + $0x70] sm:$0xff]
    %v140 = vld [vmem:[%s124 + $0x78] sm:$0xff]
    %v141 = vlaneseq
    %v142 = vshrl.u32 %v141, 7
    %v143 = vsub.s32 1, %v142
    %v144 = vrot.slane %v42, %v143
    %145 = vmatprep.subr.mxu0 0.0
    %146 = vmatpush1.msra.mxu0 %v125
    %147 = vmatprep.subr.mxu0 0.0
    %148 = vmatpush1.msra.mxu0 %v126
    %149 = vmatprep.subr.mxu0 0.0
    %150 = vmatpush1.msra.mxu0 %v127
    %151 = vmatprep.subr.mxu0 0.0
    %152 = vmatpush1.msra.mxu0 %v128
    %153 = vmatprep.subr.mxu0 0.0
    %154 = vmatpush1.msra.mxu0 %v129
    %155 = vmatprep.subr.mxu0 0.0
    %156 = vmatpush1.msra.mxu0 %v130
    %157 = vmatprep.subr.mxu0 0.0
    %158 = vmatpush1.msra.mxu0 %v131
    %159 = vmatprep.subr.mxu0 0.0
    %160 = vmatpush1.msra.mxu0 %v132
    %161 = vmatprep.subr.mxu0 0.0
    %162 = vmatpush1.msra.mxu0 %v133
    %163 = vmatprep.subr.mxu0 0.0
    %164 = vmatpush1.msra.mxu0 %v134
    %165 = vmatprep.subr.mxu0 0.0
    %166 = vmatpush1.msra.mxu0 %v135
    %167 = vmatprep.subr.mxu0 0.0
    %168 = vmatpush1.msra.mxu0 %v136
    %169 = vmatprep.subr.mxu0 0.0
    %170 = vmatpush1.msra.mxu0 %v137
    %171 = vmatprep.subr.mxu0 0.0
    %172 = vmatpush1.msra.mxu0 %v138
    %173 = vmatprep.subr.mxu0 0.0
    %174 = vmatpush1.msra.mxu0 %v139
    %175 = vmatprep.subr.mxu0 0.0
    %176 = vmatpush1.msra.mxu0 %v140
    %177 = vmatprep.subr.mxu0 0.0
    %178 = vmatpush1.msra.mxu0 0.0
    %179 = vmatprep.subr.mxu0 0.0
    %180 = vmatpush1.msra.mxu0 0.0
    %181 = vmatprep.subr.mxu0 0.0
    %182 = vmatpush1.msra.mxu0 0.0
    %183 = vmatprep.subr.mxu0 0.0
    %184 = vmatpush1.msra.mxu0 0.0
    %185 = vmatprep.subr.mxu0 0.0
    %186 = vmatpush1.msra.mxu0 0.0
    %187 = vmatprep.subr.mxu0 0.0
    %188 = vmatpush1.msra.mxu0 0.0
    %189 = vmatprep.subr.mxu0 0.0
    %190 = vmatpush1.msra.mxu0 0.0
    %191 = vmatprep.subr.mxu0 0.0
    %192 = vmatpush1.msra.mxu0 0.0
    %193 = vmatprep.subr.mxu0 0.0
    %194 = vmatpush1.msra.mxu0 0.0
    %195 = vmatprep.subr.mxu0 0.0
    %196 = vmatpush1.msra.mxu0 0.0
    %197 = vmatprep.subr.mxu0 0.0
    %198 = vmatpush1.msra.mxu0 0.0
    %199 = vmatprep.subr.mxu0 0.0
    %200 = vmatpush1.msra.mxu0 0.0
    %201 = vmatprep.subr.mxu0 0.0
    %202 = vmatpush1.msra.mxu0 0.0
    %203 = vmatprep.subr.mxu0 0.0
    %204 = vmatpush1.msra.mxu0 0.0
    %205 = vmatprep.subr.mxu0 0.0
    %206 = vmatpush1.msra.mxu0 0.0
    %207 = vmatprep.subr.mxu0 0.0
    %208 = vmatpush1.msra.mxu0 0.0
    %209 = vmatprep.mubr.f32.mxu0 0.0
    %210 = vmatmul.mubr.f32.gmra.mrb[0].mxu0 %v123
    %v211 = vpop.f32.mrb[0].mxu0
    %v212 = vadd.f32 %v144, %v211
    %v213 = vpop.f32.mrb[0].mxu0
    %214 = vdwg.mxu0
    %v215 = vtanh.pop %v212
    %s216 = scalar_lea.vmem [#allocation5], 256
    %v217 = vld [vmem:[%s216] sm:$0xff]
    %v218 = vld [vmem:[%s216 + $0x8] sm:$0xff]
    %v219 = vld [vmem:[%s216 + $0x10] sm:$0xff]
    %v220 = vld [vmem:[%s216 + $0x18] sm:$0xff]
    %v221 = vld [vmem:[%s216 + $0x20] sm:$0xff]
    %v222 = vld [vmem:[%s216 + $0x28] sm:$0xff]
    %v223 = vld [vmem:[%s216 + $0x30] sm:$0xff]
    %v224 = vld [vmem:[%s216 + $0x38] sm:$0xff]
    %v225 = vld [vmem:[%s216 + $0x40] sm:$0xff]
    %v226 = vld [vmem:[%s216 + $0x48] sm:$0xff]
    %v227 = vld [vmem:[%s216 + $0x50] sm:$0xff]
    %v228 = vld [vmem:[%s216 + $0x58] sm:$0xff]
    %v229 = vld [vmem:[%s216 + $0x60] sm:$0xff]
    %v230 = vld [vmem:[%s216 + $0x68] sm:$0xff]
    %v231 = vld [vmem:[%s216 + $0x70] sm:$0xff]
    %v232 = vld [vmem:[%s216 + $0x78] sm:$0xff]
    %v233 = vlaneseq
    %v234 = vshrl.u32 %v233, 7
    %v235 = vsub.s32 2, %v234
    %v236 = vrot.slane %v42, %v235
    %237 = vmatprep.subr.mxu0 0.0
    %238 = vmatpush1.msra.mxu0 %v217
    %239 = vmatprep.subr.mxu0 0.0
    %240 = vmatpush1.msra.mxu0 %v218
    %241 = vmatprep.subr.mxu0 0.0
    %242 = vmatpush1.msra.mxu0 %v219
    %243 = vmatprep.subr.mxu0 0.0
    %244 = vmatpush1.msra.mxu0 %v220
    %245 = vmatprep.subr.mxu0 0.0
    %246 = vmatpush1.msra.mxu0 %v221
    %247 = vmatprep.subr.mxu0 0.0
    %248 = vmatpush1.msra.mxu0 %v222
    %249 = vmatprep.subr.mxu0 0.0
    %250 = vmatpush1.msra.mxu0 %v223
    %251 = vmatprep.subr.mxu0 0.0
    %252 = vmatpush1.msra.mxu0 %v224
    %253 = vmatprep.subr.mxu0 0.0
    %254 = vmatpush1.msra.mxu0 %v225
    %255 = vmatprep.subr.mxu0 0.0
    %256 = vmatpush1.msra.mxu0 %v226
    %257 = vmatprep.subr.mxu0 0.0
    %258 = vmatpush1.msra.mxu0 %v227
    %259 = vmatprep.subr.mxu0 0.0
    %260 = vmatpush1.msra.mxu0 %v228
    %261 = vmatprep.subr.mxu0 0.0
    %262 = vmatpush1.msra.mxu0 %v229
    %263 = vmatprep.subr.mxu0 0.0
    %264 = vmatpush1.msra.mxu0 %v230
    %265 = vmatprep.subr.mxu0 0.0
    %266 = vmatpush1.msra.mxu0 %v231
    %267 = vmatprep.subr.mxu0 0.0
    %268 = vmatpush1.msra.mxu0 %v232
    %269 = vmatprep.subr.mxu0 0.0
    %270 = vmatpush1.msra.mxu0 0.0
    %271 = vmatprep.subr.mxu0 0.0
    %272 = vmatpush1.msra.mxu0 0.0
    %273 = vmatprep.subr.mxu0 0.0
    %274 = vmatpush1.msra.mxu0 0.0
    %275 = vmatprep.subr.mxu0 0.0
    %276 = vmatpush1.msra.mxu0 0.0
    %277 = vmatprep.subr.mxu0 0.0
    %278 = vmatpush1.msra.mxu0 0.0
    %279 = vmatprep.subr.mxu0 0.0
    %280 = vmatpush1.msra.mxu0 0.0
    %281 = vmatprep.subr.mxu0 0.0
    %282 = vmatpush1.msra.mxu0 0.0
    %283 = vmatprep.subr.mxu0 0.0
    %284 = vmatpush1.msra.mxu0 0.0
    %285 = vmatprep.subr.mxu0 0.0
    %286 = vmatpush1.msra.mxu0 0.0
    %287 = vmatprep.subr.mxu0 0.0
    %288 = vmatpush1.msra.mxu0 0.0
    %289 = vmatprep.subr.mxu0 0.0
    %290 = vmatpush1.msra.mxu0 0.0
    %291 = vmatprep.subr.mxu0 0.0
    %292 = vmatpush1.msra.mxu0 0.0
    %293 = vmatprep.subr.mxu0 0.0
    %294 = vmatpush1.msra.mxu0 0.0
    %295 = vmatprep.subr.mxu0 0.0
    %296 = vmatpush1.msra.mxu0 0.0
    %297 = vmatprep.subr.mxu0 0.0
    %298 = vmatpush1.msra.mxu0 0.0
    %299 = vmatprep.subr.mxu0 0.0
    %300 = vmatpush1.msra.mxu0 0.0
    %301 = vmatprep.mubr.f32.mxu0 0.0
    %302 = vmatmul.mubr.f32.gmra.mrb[0].mxu0 %v215
    %v303 = vpop.f32.mrb[0].mxu0
    %v304 = vadd.f32 %v236, %v303
    %v305 = vpop.f32.mrb[0].mxu0
    %306 = vdwg.mxu0
    %v307 = vlaneseq
    %v308 = vand.u32 %v307, 127
    %vm309 = vcmp.lt.s32.totalorder %v308, 9
    %v310 = vsel %vm309, %v304, -1e+30
    %vm311 = vcmask 1043456
    %v312 = vsel %vm311, %v310, -inf
    %313 = vmax.xlane.f32.xlu0 %v312
    %v314 = vpop.xlane.xlu0 %313
    %v315 = vsub.f32 %v304, %v314
    %v316 = vmul.f32 %v315, 1.442695
    %v317 = vpow.pop %v316
    %v318 = vsel %vm309, %v317, 0.0
    %v319 = vsel %vm311, %v318, 0.0
    %320 = vadd.xlane.f32.xlu0 %v319
    %v321 = vpop.xlane.xlu0 %320
    %v322 = vrcp.pop %v321
    %v323 = vmul.f32 %v318, %v322
    %vm324 = vcmp.eq.s32.totalorder %v308, 9
    %v325 = vsel %vm324, %v304, %v323
    %326 = vst [vmem:[#allocation7] sm:$0xf] %v325
    // Predicated region
    $region22: #{tpu_custom_call.1} parent=1 // pred_check
      _
    $region23: #{tpu_custom_call.1} parent=1 // pred_check_branch
      %328 = sbr.rel (0) target = $region25
    $region24: #{tpu_custom_call.1} parent=1 // pred_region
      %s330 = ssub.s32 64, 64
      %331 = vsyncadd [#allocation4], %s330
      %s333 = sshll.u32 [#allocation7], 4
      %s334 = int_to_ptr.vmem [resolvable:$true] %s333
      %336 = dma.vmem_to_hbm [thread:$0]  %s334, 64, %s3, [#allocation4]
    $region25: #{tpu_custom_call.1} parent=1 // pred_fallthru
      _
    // Predicated region
    $region26: #{tpu_custom_call.1} parent=1 // pred_check
      _
    $region27: #{tpu_custom_call.1} parent=1 // pred_check_branch
      %338 = sbr.rel (0) target = $region29
    $region28: #{tpu_custom_call.1} parent=1 // pred_region
      %339 = dma.done [#allocation4], 64
    $region29: #{tpu_custom_call.1} parent=1 // pred_fallthru
      _
    %340 = vsyncpa [#allocation3], 1
    %341 = vsyncpa [#allocation6], 1
    %342 = vsyncpa [#allocation4], 1

</llo_original>
